<compile_context>
chip_gen: v6e
topology: v6e:2x2x1
jax: 0.10.0
libtpu: 0.0.40
codegen_flags: <defaults>
</compile_context>

<pallas_src>
import jax
import jax.numpy as jnp
from jax import lax
from jax.experimental import pallas as pl
from jax.experimental.pallas import tpu as pltpu


_MAX_BLOCK_BYTES = 8 * 1024 * 1024   # per-input-block DMA target (>= 4 MiB)


def _vmem_capacity_bytes() -> int:
    """Physical VMEM capacity of the current TPU (fallback: 128 MiB)."""
    try:
        info = pltpu.get_tpu_info()
        cap = getattr(info, "vmem_capacity_bytes", None)
        if cap:
            return int(cap)
    except Exception:
        pass
    return 128 * 1024 * 1024


def _is_v7x() -> bool:
    try:
        return "v7" in jax.devices()[0].device_kind.lower()
    except Exception:
        return False


def _choose_tile_rows(B: int, C: int, itemsize: int) -> int:
    """Row tile sized from the chip's VMEM capacity (generation-aware)."""
    vmem_cap = _vmem_capacity_bytes()
    budget = (vmem_cap * 3) // 8          # ~48 MiB on v5e/v6e, ~24 MiB on v7x
    # Per-element VMEM footprint: double-buffered input block plus ~3
    # block-sized f32 intermediates inside the body (diff / exp / sums).
    per_elem = 2 * itemsize + 3 * 4
    tb = budget // max(1, C * per_elem)
    tb = min(tb, _MAX_BLOCK_BYTES // max(1, C * itemsize))
    tb = max(8, (int(tb) // 8) * 8)       # sublane-aligned
    if tb >= B:
        return B                          # full-dim block is always legal
    return tb


def _make_kernel(B: int, C: int, TB: int, tiles_per_shard: int,
                 use_mxu_row_sum: bool):
    inv_c = 1.0 / C                       # hoisted constant; avoids a divide

    def kernel(x_ref, o_ref):
        s = pl.program_id(0)              # shard (parallel axis)
        i = pl.program_id(1)              # row-tile within shard (arbitrary)

        @pl.when(i == 0)
        def _init():
            o_ref[...] = jnp.zeros_like(o_ref)

        # Numerically-stable logsumexp over classes (lane axis).  The max is
        # exact in the input dtype; exp/sums accumulate in f32 without
        # materializing a full f32 copy of the tile.
        m = jnp.max(x_ref[...], axis=1, keepdims=True)                 # (TB, 1)
        p = jnp.exp((x_ref[...] - m).astype(jnp.float32))              # (TB, C)
        lse = m.astype(jnp.float32) + jnp.log(
            jnp.sum(p, axis=1, keepdims=True))                         # (TB, 1)

        if use_mxu_row_sum:
            # v7x + bf16: plain row-sum on the otherwise-idle MXU (x*1
            # products are exact, accumulation in f32).  (C, 128) ones keeps
            # the output lane dimension native; all lanes hold the same sum.
            ones = jnp.ones((C, 128), dtype=x_ref.dtype)
            row_sum = jnp.dot(x_ref[...], ones,
                              preferred_element_type=jnp.float32)[:, :1]
        else:
            row_sum = jnp.sum(x_ref[...].astype(jnp.float32),
                              axis=1, keepdims=True)                   # (TB, 1)

        per_row = row_sum * inv_c - lse                                # mean - lse

        # Mask rows past the real batch (remainder tiles / clamped virtual
        # tiles read block padding -> garbage).  Mask by the *virtual* tile id
        # and keep the mask applied BEFORE the accumulate.
        tile_id = s * tiles_per_shard + i
        row_ids = tile_id * TB + lax.broadcasted_iota(jnp.int32, (TB, 1), 0)
        per_row = jnp.where(row_ids < B, per_row, 0.0)

        # One cross-lane/sublane reduce per tile, then a lane-dense full-vreg
        # accumulate into the resident output block (no scratch needed).
        tile_sum = jnp.sum(per_row)
        o_ref[...] += jnp.broadcast_to(tile_sum, o_ref.shape)

    return kernel


def oe_loss(x: jax.Array, *, tile_rows: int | None = None,
            num_shards: int | None = None,
            use_mxu_row_sum: bool | None = None) -> jax.Array:
    """Pallas TPU implementation of OELoss.forward.  x: (B, C) float array.

    For best HBM bandwidth on all generations, feed bf16 logits; all
    in-kernel reductions are performed in f32.
    """
    B, C = x.shape
    itemsize = jnp.dtype(x.dtype).itemsize

    TB = tile_rows if tile_rows is not None else _choose_tile_rows(B, C, itemsize)
    TB = min(TB, B)
    if TB < B:
        TB = max(8, (TB // 8) * 8)        # block sublane dim must be 8-aligned

    n_tiles = pl.cdiv(B, TB)

    if num_shards is None:
        # 1 TC on v5e/v6e: sharding is just wasted clamped-tile DMA there.
        num_shards = 2 if _is_v7x() else 1
    num_shards = max(1, min(num_shards, n_tiles))
    tps = pl.cdiv(n_tiles, num_shards)    # tiles per shard (virtual tiles clamped)

    if use_mxu_row_sum is None:
        use_mxu_row_sum = _is_v7x() and itemsize < 4

    vmem_cap = _vmem_capacity_bytes()
    kernel = _make_kernel(B, C, TB, tps, use_mxu_row_sum)

    out = pl.pallas_call(
        kernel,
        out_shape=jax.ShapeDtypeStruct((num_shards * 8, 128), jnp.float32),
        grid_spec=pltpu.PrefetchScalarGridSpec(
            num_scalar_prefetch=0,
            grid=(num_shards, tps),
            in_specs=[
                pl.BlockSpec(
                    (TB, C),
                    lambda s, i: (jnp.minimum(s * tps + i, n_tiles - 1), 0),
                ),
            ],
            out_specs=pl.BlockSpec((8, 128), lambda s, i: (s, 0)),
        ),
        compiler_params=pltpu.CompilerParams(
            dimension_semantics=("parallel", "arbitrary"),
            vmem_limit_bytes=int(vmem_cap // 2),   # 64 MiB v5e/v6e, 32 MiB v7x
        ),
    )(x)

    # tiny cross-shard combine + final (-1/B) scale in the wrapper
    partials = out[0::8, 0]               # one scalar per shard
    return -(jnp.sum(partials) / B)


def oe_loss_ref(x: jax.Array) -> jax.Array:
    """Pure-JAX reference mirroring the PyTorch forward."""
    x = x.astype(jnp.float32)
    return -(jnp.mean(x, axis=1) - jax.nn.logsumexp(x, axis=1)).mean()


if __name__ == "__main__":
    key = jax.random.PRNGKey(0)
    k1, k2, k3 = jax.random.split(key, 3)

    # 1) small single-tile case
    x1 = jax.random.normal(k1, (8, 128), dtype=jnp.float32) * 3.0
    loss1 = oe_loss(x1)
    jax.block_until_ready(loss1)
    ref1 = oe_loss_ref(x1)
    assert jnp.allclose(loss1, ref1, rtol=1e-4, atol=1e-4), (loss1, ref1)

    # 2) multi-tile accumulation + remainder-row masking + shard-clamp path
    x2 = jax.random.normal(k2, (50, 256), dtype=jnp.float32) * 3.0
    loss2 = oe_loss(x2, tile_rows=8, num_shards=2)
    jax.block_until_ready(loss2)
    ref2 = oe_loss_ref(x2)
    assert jnp.allclose(loss2, ref2, rtol=1e-4, atol=1e-4), (loss2, ref2)

    # 3) bf16 logits (recommended input dtype: halves HBM traffic; f32 math)
    x3 = (jax.random.normal(k3, (48, 128), dtype=jnp.float32) * 3.0
          ).astype(jnp.bfloat16)
    loss3 = oe_loss(x3, tile_rows=16)
    jax.block_until_ready(loss3)
    ref3 = oe_loss_ref(x3)
    assert jnp.allclose(loss3, ref3, rtol=5e-3, atol=5e-3), (loss3, ref3)

    print("KERNEL_OK")
</pallas_src>

<mosaic_0001>
module attributes {stable_mosaic.version = 11 : i64} {
  func.func @kernel(%arg0: i32, %arg1: i32, %arg2: memref<8x128xf32, #tpu.memory_space<vmem>>, %arg3: memref<8x128xf32, #tpu.memory_space<vmem>>) attributes {dimension_semantics = [#tpu.dimension_semantics<parallel>, #tpu.dimension_semantics<arbitrary>], iteration_bounds = array<i64: 1, 1>, scalar_prefetch = 0 : i64, scratch_operands = 0 : i64, tpu.core_type = #tpu.core_type<tc>, window_params = [{transform_indices = @transform_0, window_bounds = array<i64: 8, 128>}, {transform_indices = @transform_1, window_bounds = array<i64: 8, 128>}]} {
    %c0_i32 = arith.constant 0 : i32
    %0 = arith.cmpi eq, %arg1, %c0_i32 : i32
    %1 = arith.extui %0 : i1 to i32
    %c0_i32_0 = arith.constant 0 : i32
    %2 = arith.cmpi ne, %1, %c0_i32_0 : i32
    scf.if %2 {
      %cst_16 = arith.constant 0.000000e+00 : f32
      %38 = vector.broadcast %cst_16 : f32 to vector<8x128xf32>
      %c0_17 = arith.constant 0 : index
      %c0_18 = arith.constant 0 : index
      %39 = vector.load %arg3[%c0_17, %c0_18] : memref<8x128xf32, #tpu.memory_space<vmem>>, vector<8x128xf32>
      tpu.vector_store %arg3[%c0_17, %c0_18], %38 {strides = array<i32>} : memref<8x128xf32, #tpu.memory_space<vmem>>, vector<8x128xf32>,
    } else {
    }
    %c0 = arith.constant 0 : index
    %c0_1 = arith.constant 0 : index
    %3 = vector.load %arg2[%c0, %c0_1] : memref<8x128xf32, #tpu.memory_space<vmem>>, vector<8x128xf32>
    %cst = arith.constant dense<0xFF800000> : vector<8xf32>
    %4 = vector.multi_reduction <maximumf>, %3, %cst [1] : vector<8x128xf32> to vector<8xf32>
    %5 = vector.shape_cast %4 : vector<8xf32> to vector<8x1xf32>
    %c0_2 = arith.constant 0 : index
    %c0_3 = arith.constant 0 : index
    %6 = vector.load %arg2[%c0_2, %c0_3] : memref<8x128xf32, #tpu.memory_space<vmem>>, vector<8x128xf32>
    %7 = vector.broadcast %5 : vector<8x1xf32> to vector<8x128xf32>
    %8 = arith.subf %6, %7 : vector<8x128xf32>
    %9 = math.exp %8 : vector<8x128xf32>
    %cst_4 = arith.constant dense<0.000000e+00> : vector<8xf32>
    %10 = vector.multi_reduction <add>, %9, %cst_4 [1] : vector<8x128xf32> to vector<8xf32>
    %11 = vector.shape_cast %10 : vector<8xf32> to vector<8x1xf32>
    %12 = math.log %11 : vector<8x1xf32>
    %13 = arith.addf %5, %12 : vector<8x1xf32>
    %c0_5 = arith.constant 0 : index
    %c0_6 = arith.constant 0 : index
    %14 = vector.load %arg2[%c0_5, %c0_6] : memref<8x128xf32, #tpu.memory_space<vmem>>, vector<8x128xf32>
    %cst_7 = arith.constant dense<0.000000e+00> : vector<8xf32>
    %15 = vector.multi_reduction <add>, %14, %cst_7 [1] : vector<8x128xf32> to vector<8xf32>
    %16 = vector.shape_cast %15 : vector<8xf32> to vector<8x1xf32>
    %cst_8 = arith.constant 7.812500e-03 : f32
    %17 = vector.broadcast %cst_8 : f32 to vector<8x1xf32>
    %18 = arith.mulf %16, %17 : vector<8x1xf32>
    %19 = arith.subf %18, %13 : vector<8x1xf32>
    %c1_i32 = arith.constant 1 : i32
    %20 = arith.muli %arg0, %c1_i32 : i32
    %21 = arith.addi %20, %arg1 : i32
    %c8_i32 = arith.constant 8 : i32
    %22 = arith.muli %21, %c8_i32 : i32
    %23 = tpu.iota {dimensions = array<i32: 0>} : vector<8x1xi32>
    %24 = vector.broadcast %22 : i32 to vector<8x1xi32>
    %25 = arith.addi %24, %23 : vector<8x1xi32>
    %c8_i32_9 = arith.constant 8 : i32
    %26 = vector.broadcast %c8_i32_9 : i32 to vector<8x1xi32>
    %27 = arith.cmpi slt, %25, %26 : vector<8x1xi32>
    %cst_10 = arith.constant 0.000000e+00 : f32
    %28 = vector.broadcast %cst_10 : f32 to vector<8x1xf32>
    %29 = arith.select %27, %19, %28 : vector<8x1xi1>, vector<8x1xf32>
    %30 = vector.shape_cast %29 : vector<8x1xf32> to vector<1x8x1xf32>
    %cst_11 = arith.constant dense<0.000000e+00> : vector<1xf32>
    %31 = vector.multi_reduction <add>, %30, %cst_11 [1, 2] : vector<1x8x1xf32> to vector<1xf32>
    %32 = vector.shape_cast %31 : vector<1xf32> to vector<1x1x1xf32>
    %33 = vector.extract %32[0, 0, 0] : f32 from vector<1x1x1xf32>
    %c0_12 = arith.constant 0 : index
    %c0_13 = arith.constant 0 : index
    %34 = vector.load %arg3[%c0_12, %c0_13] : memref<8x128xf32, #tpu.memory_space<vmem>>, vector<8x128xf32>
    %35 = vector.broadcast %33 : f32 to vector<8x128xf32>
    %36 = arith.addf %34, %35 : vector<8x128xf32>
    %c0_14 = arith.constant 0 : index
    %c0_15 = arith.constant 0 : index
    %37 = vector.load %arg3[%c0_14, %c0_15] : memref<8x128xf32, #tpu.memory_space<vmem>>, vector<8x128xf32>
    tpu.vector_store %arg3[%c0_14, %c0_15], %36 {strides = array<i32>} : memref<8x128xf32, #tpu.memory_space<vmem>>, vector<8x128xf32>,
    return
  }
  func.func @transform_0(%arg0: i32, %arg1: i32) -> (i32, i32) {
    %c1_i32 = arith.constant 1 : i32
    %0 = arith.muli %arg0, %c1_i32 : i32
    %1 = arith.addi %0, %arg1 : i32
    %c0_i32 = arith.constant 0 : i32
    %2 = arith.minsi %1, %c0_i32 : i32
    %c0_i32_0 = arith.constant 0 : i32
    %c0_i32_1 = arith.constant 0 : i32
    return %2, %c0_i32_0 : i32, i32
  }
  func.func @transform_1(%arg0: i32, %arg1: i32) -> (i32, i32) {
    %c0_i32 = arith.constant 0 : i32
    %c0_i32_0 = arith.constant 0 : i32
    return %arg0, %c0_i32 : i32, i32
  }
}

</mosaic_0001>

<llo_original>
// kernel: tpu_custom_call.1
$region0: #{tpu_custom_call.1}
  #allocation0 [shape = 'u32[]', space=smem, size = 0x4, offset = 0x4, fixed_abs, tag = 'smem constant byte address 0x4 - core index']
  #allocation1 [shape = 'u32[144,128]{1,0:T(1,128)}', space=vmem, size = 0x12000, scoped, tag = 'internal scratch']
  %s0 = inlined_call_operand.hbm [shape: f32[8,128], index: 0, kind: input, shape index: {}]
  %s1 = inlined_call_operand.hbm [shape: f32[8,128], index: 1, kind: output, shape index: {}]
  %s2 = sld [smem:[#allocation0]]
  $region22: #{tpu_custom_call.1} parent=0
    _
  %s4 = ssub.s32 1, %s2
  %s5 = scalar_select 0, %s4, %s2
  $region1: #{tpu_custom_call.1} parent=0
    #allocation2 [shape = 'u8[4096]{0}', space=vmem, size = 0x1000, scoped, tag = 'input window, operand 0, single buffered']
    #allocation3 [shape = 's32[1]{0}', space=sflag, size = 0x4, scoped, tag = 'scoped memory for tpu_custom_call.1']
    #allocation4 [shape = 's32[1]{0}', space=sflag, size = 0x4, scoped, tag = 'scoped memory for tpu_custom_call.1']
    #allocation5 [shape = 'u8[4096]{0}', space=vmem, size = 0x1000, scoped, tag = 'output window, operand 0, single buffered']
    %6 = vsyncpa [#allocation3], 0
    %7 = vsyncpa [#allocation4], 0
    // Predicated region
    $region2: #{tpu_custom_call.1} parent=1 // pred_check
      _
    $region3: #{tpu_custom_call.1} parent=1 // pred_check_branch
      %9 = sbr.rel (0) target = $region5
    $region4: #{tpu_custom_call.1} parent=1 // pred_region
      %s10 = sadd.s32 0, 0
      %p11 = scmp.lt.s32.totalorder %s10, 0
      %s12 = scalar_select %p11, %s10, 0
      %s14 = ssub.s32 128, 128
      %15 = vsyncadd [#allocation3], %s14
      %s16 = smul.addr %s12, 128
      %s17 = scalar_lea.hbm %s0, %s16
      %s19 = sshll.u32 [#allocation2], 4
      %s20 = int_to_ptr.vmem [resolvable:$true] %s19
      %22 = dma.hbm_to_vmem [thread:$0]  %s17, 128, %s20, [#allocation3]
    $region5: #{tpu_custom_call.1} parent=1 // pred_fallthru
      _
    // Predicated region
    $region6: #{tpu_custom_call.1} parent=1 // pred_check
      _
    $region7: #{tpu_custom_call.1} parent=1 // pred_check_branch
      %24 = sbr.rel (0) target = $region9
    $region8: #{tpu_custom_call.1} parent=1 // pred_region
      %25 = dma.done [#allocation3], 128
    $region9: #{tpu_custom_call.1} parent=1 // pred_fallthru
      _
    %s26 = sadd.s32 0, 0
    %p27 = scmp.lt.s32.totalorder %s26, 0
    %s28 = scalar_select %p27, %s26, 0
    %p29 = scmp.eq.s32.totalorder 0, 0
    // Predicated region
    $region10: #{tpu_custom_call.1} parent=1 // pred_check
      %p30 = pneg %p29
    $region11: #{tpu_custom_call.1} parent=1 // pred_check_branch
      %32 = sbr.rel (%p30) target = $region13
    $region12: #{tpu_custom_call.1} parent=1 // pred_region
      %33 = vst [vmem:[#allocation5] sm:$0xff] 0.0
    $region13: #{tpu_custom_call.1} parent=1 // pred_fallthru
      _
    %v34 = vld [vmem:[#allocation2] sm:$0xff]
    %35 = vmax.xlane.f32.xlu0 %v34
    %v36 = vpop.xlane.xlu0 %35
    %v37 = vsub.f32 %v34, %v36
    %v38 = vmul.f32 %v37, 1.442695
    %v39 = vpow.pop %v38
    %40 = vadd.xlane.f32.xlu0 %v39
    %v41 = vpop.xlane.xlu0 %40
    %v42 = vlog2.pop %v41
    %v43 = vmul.f32 %v42, 0.6931472
    %v44 = vadd.f32 %v36, %v43
    %45 = vadd.xlane.f32.xlu0 %v34
    %v46 = vpop.xlane.xlu0 %45
    %v47 = vmul.f32 %v46, 0.0078125
    %v48 = vsub.f32 %v47, %v44
    %s49 = sadd.s32 0, 0
    %s50 = smul.u32 %s49, 8
    %v51 = vlaneseq
    %v52 = vshrl.u32 %v51, 7
    %v53 = vstv %s50
    %v54 = vadd.s32 %v53, %v52
    %vm55 = vcmp.lt.s32.totalorder %v54, 8
    %v56 = vsel %vm55, %v48, 0.0
    %vm57 = vcmask 7168
    %v58 = vsel %vm57, %v56, 0.0
    %59 = vadd.xlane.f32.xlu0 %v58
    %v60 = vpop.xlane.xlu0 %59
    %v61 = vrot.slane %v60, 4
    %v62 = vadd.f32 %v60, %v61
    %v63 = vrot.slane %v62, 2
    %v64 = vadd.f32 %v62, %v63
    %v65 = vrot.slane %v64, 1
    %v66 = vadd.f32 %v64, %v65
    %s67 = vtos %v66
    %v68 = vld [vmem:[#allocation5] sm:$0xff]
    %v69 = vstv %s67
    %v70 = vadd.f32 %v68, %v69
    %71 = vst [vmem:[#allocation5] sm:$0xff] %v70
    // Predicated region
    $region14: #{tpu_custom_call.1} parent=1 // pred_check
      _
    $region15: #{tpu_custom_call.1} parent=1 // pred_check_branch
      %73 = sbr.rel (0) target = $region17
    $region16: #{tpu_custom_call.1} parent=1 // pred_region
      %s75 = ssub.s32 128, 128
      %76 = vsyncadd [#allocation4], %s75
      %s78 = sshll.u32 [#allocation5], 4
      %s79 = int_to_ptr.vmem [resolvable:$true] %s78
      %81 = dma.vmem_to_hbm [thread:$0]  %s79, 128, %s1, [#allocation4]
    $region17: #{tpu_custom_call.1} parent=1 // pred_fallthru
      _
    // Predicated region
    $region18: #{tpu_custom_call.1} parent=1 // pred_check
      _
    $region19: #{tpu_custom_call.1} parent=1 // pred_check_branch
      %83 = sbr.rel (0) target = $region21
    $region20: #{tpu_custom_call.1} parent=1 // pred_region
      %84 = dma.done [#allocation4], 128
    $region21: #{tpu_custom_call.1} parent=1 // pred_fallthru
      _
    %85 = vsyncpa [#allocation3], 1
    %86 = vsyncpa [#allocation4], 1

</llo_original>
